<compile_context>
chip_gen: v7x
topology: tpu7x:2x2x1
jax: 0.10.0
libtpu: 0.0.40
codegen_flags: <defaults>
</compile_context>

<pallas_src>
import functools

import jax
import jax.numpy as jnp
from jax.experimental import pallas as pl
from jax.experimental.pallas import tpu as pltpu


LANE = 128      # lane width (last dim)
SUBLANE = 8     # sublane width (second-to-last dim, f32)


def _round_up(n, m):
    return ((n + m - 1) // m) * m


def _mlp_fused_kernel(*refs, n_layers):
    """Fused MLP forward over one batch tile.

    refs layout: (x_ref, w0_ref, b0_ref, w1_ref, b1_ref, ..., o_ref)
      x_ref: (TB, P_in)         f32  VMEM
      wi:    (P_in_i, P_out_i)  bf16 VMEM  (zero-padded)
      bi:    (1, P_out_i)       f32  VMEM  (zero-padded)
      o_ref: (TB, P_out_last)   f32  VMEM
    The per-layer loop is a static Python loop; activations are carried in
    vregs/VMEM (never spill to HBM between layers).
    """
    x_ref = refs[0]
    o_ref = refs[-1]
    wb_refs = refs[1:-1]

    h = x_ref[...]  # f32
    for i in range(n_layers):
        w = wb_refs[2 * i][...]          # bf16, zero-padded
        b = wb_refs[2 * i + 1][...]      # f32,  zero-padded
        # bf16 operands on the MXU, f32 accumulation.
        y = jnp.dot(h.astype(jnp.bfloat16), w,
                    preferred_element_type=jnp.float32) + b
        if i != n_layers - 1:
            y = jnp.maximum(y, 0.0)      # ReLU in f32 (VPU)
        h = y
    o_ref[...] = h.astype(o_ref.dtype)


def init_mlp_params(key, in_dim, out_dim, hid_dim, n_layer):
    """Deterministic init mirroring torch.nn.Linear default:
    U(-1/sqrt(fan_in), 1/sqrt(fan_in)) for both weights and biases."""
    params = []
    dims = ([(in_dim, hid_dim)]
            + [(hid_dim, hid_dim)] * (n_layer - 1)
            + [(hid_dim, out_dim)])
    for (fan_in, fan_out) in dims:
        key, kw, kb = jax.random.split(key, 3)
        bound = 1.0 / (fan_in ** 0.5)
        w = jax.random.uniform(kw, (fan_in, fan_out), jnp.float32, -bound, bound)
        b = jax.random.uniform(kb, (1, fan_out), jnp.float32, -bound, bound)
        params.append((w, b))
    return params


def pad_params(params):
    """Zero-pad every (w, b) to 128-lane multiples and pre-cast weights to bf16.

    Zero padding keeps the math exact: padded input lanes hit zero weight rows,
    padded output lanes get 0 (weight col) + 0 (bias) = 0, and ReLU(0) = 0, so
    no garbage leaks into real lanes across layers.
    """
    padded = []
    for (w, b) in params:
        fi, fo = w.shape
        pfi, pfo = _round_up(fi, LANE), _round_up(fo, LANE)
        w_p = jnp.zeros((pfi, pfo), jnp.float32).at[:fi, :fo].set(w)
        b_p = jnp.zeros((1, pfo), jnp.float32).at[:, :fo].set(b)
        padded.append((w_p.astype(jnp.bfloat16), b_p))
    return padded


def mlp_forward_fused(x, padded_params, out_dim):
    """Single fused pallas_call for the whole MLP, tiled over the batch dim."""
    B, in_dim = x.shape
    p_in = _round_up(in_dim, LANE)
    n_layers = len(padded_params)
    p_out_last = padded_params[-1][0].shape[1]

    # Batch tile: one block for small batches, 256-row tiles otherwise.
    if B <= 1024:
        tb = _round_up(B, SUBLANE)
    else:
        tb = 256
    pB = _round_up(B, tb)
    grid = (pB // tb,)

    # Zero-pad the input to sublane/lane-aligned shape.
    x_p = jnp.zeros((pB, p_in), jnp.float32).at[:B, :in_dim].set(x)

    flat_wb = []
    for (w, b) in padded_params:
        flat_wb.extend([w, b])

    # Cost estimate: matmul flops + bytes for x, all weights/biases, output.
    flops = 0
    bytes_accessed = x_p.size * 4 + pB * p_out_last * 4
    for (w, b) in padded_params:
        flops += 2 * pB * w.shape[0] * w.shape[1]
        bytes_accessed += w.size * 2 + b.size * 4

    kernel = functools.partial(_mlp_fused_kernel, n_layers=n_layers)

    # x / out are tiled along the batch grid axis; weights & biases use a
    # constant block index so they stay resident in VMEM across grid steps.
    x_spec = pl.BlockSpec((tb, p_in), lambda i: (i, 0))
    out_spec = pl.BlockSpec((tb, p_out_last), lambda i: (i, 0))
    wb_specs = []
    for (w, b) in padded_params:
        wb_specs.append(pl.BlockSpec(w.shape, lambda i: (0, 0)))
        wb_specs.append(pl.BlockSpec(b.shape, lambda i: (0, 0)))

    out_p = pl.pallas_call(
        kernel,
        out_shape=jax.ShapeDtypeStruct((pB, p_out_last), jnp.float32),
        grid=grid,
        in_specs=[x_spec] + wb_specs,
        out_specs=out_spec,
        compiler_params=pltpu.CompilerParams(
            dimension_semantics=("parallel",)),
        cost_estimate=pl.CostEstimate(
            flops=flops, transcendentals=0, bytes_accessed=bytes_accessed),
    )(x_p, *flat_wb)

    # Slice padded rows / output lanes back to the true (B, out_dim).
    return out_p[:B, :out_dim]


if __name__ == "__main__":
    # Small shapes consistent with the module's forward (act='relu').
    batch, in_dim, hid_dim, out_dim, n_layer = 8, 32, 32, 16, 3

    key = jax.random.PRNGKey(0)
    key, kx = jax.random.split(key)
    x = jax.random.normal(kx, (batch, in_dim), jnp.float32)

    params = init_mlp_params(key, in_dim, out_dim, hid_dim, n_layer)
    padded_params = pad_params(params)

    out = mlp_forward_fused(x, padded_params, out_dim)
    out = jax.block_until_ready(out)

    # Reference in plain f32 JAX (same math). bf16 matmul operands => loosen tol.
    ref = x
    for i, (w, b) in enumerate(params):
        ref = ref @ w + b
        if i != len(params) - 1:
            ref = jnp.maximum(ref, 0.0)

    assert out.shape == (batch, out_dim)
    assert jnp.allclose(out, ref, atol=2e-2, rtol=2e-2), (
        jnp.max(jnp.abs(out - ref)))

    print("KERNEL_OK")
</pallas_src>

<mosaic_0001>
module attributes {stable_mosaic.version = 11 : i64} {
  func.func @_mlp_fused_kernel(%arg0: i32, %arg1: memref<8x128xf32, #tpu.memory_space<vmem>>, %arg2: memref<128x128xbf16, #tpu.memory_space<vmem>>, %arg3: memref<1x128xf32, #tpu.memory_space<vmem>>, %arg4: memref<128x128xbf16, #tpu.memory_space<vmem>>, %arg5: memref<1x128xf32, #tpu.memory_space<vmem>>, %arg6: memref<128x128xbf16, #tpu.memory_space<vmem>>, %arg7: memref<1x128xf32, #tpu.memory_space<vmem>>, %arg8: memref<128x128xbf16, #tpu.memory_space<vmem>>, %arg9: memref<1x128xf32, #tpu.memory_space<vmem>>, %arg10: memref<8x128xf32, #tpu.memory_space<vmem>>) attributes {dimension_semantics = [#tpu.dimension_semantics<parallel>], iteration_bounds = array<i64: 1>, scalar_prefetch = 0 : i64, scratch_operands = 0 : i64, tpu.core_type = #tpu.core_type<tc>, window_params = [{transform_indices = @transform_0, window_bounds = array<i64: 8, 128>}, {pipeline_mode = #tpu.pipeline_mode<synchronous>, transform_indices = @transform_1, window_bounds = array<i64: 128, 128>}, {pipeline_mode = #tpu.pipeline_mode<synchronous>, transform_indices = @transform_2, window_bounds = array<i64: 1, 128>}, {pipeline_mode = #tpu.pipeline_mode<synchronous>, transform_indices = @transform_3, window_bounds = array<i64: 128, 128>}, {pipeline_mode = #tpu.pipeline_mode<synchronous>, transform_indices = @transform_4, window_bounds = array<i64: 1, 128>}, {pipeline_mode = #tpu.pipeline_mode<synchronous>, transform_indices = @transform_5, window_bounds = array<i64: 128, 128>}, {pipeline_mode = #tpu.pipeline_mode<synchronous>, transform_indices = @transform_6, window_bounds = array<i64: 1, 128>}, {pipeline_mode = #tpu.pipeline_mode<synchronous>, transform_indices = @transform_7, window_bounds = array<i64: 128, 128>}, {pipeline_mode = #tpu.pipeline_mode<synchronous>, transform_indices = @transform_8, window_bounds = array<i64: 1, 128>}, {transform_indices = @transform_9, window_bounds = array<i64: 8, 128>}]} {
    %c0 = arith.constant 0 : index
    %c0_0 = arith.constant 0 : index
    %0 = vector.load %arg1[%c0, %c0_0] : memref<8x128xf32, #tpu.memory_space<vmem>>, vector<8x128xf32>
    %c0_1 = arith.constant 0 : index
    %c0_2 = arith.constant 0 : index
    %1 = vector.load %arg2[%c0_1, %c0_2] : memref<128x128xbf16, #tpu.memory_space<vmem>>, vector<128x128xbf16>
    %c0_3 = arith.constant 0 : index
    %c0_4 = arith.constant 0 : index
    %2 = vector.load %arg3[%c0_3, %c0_4] : memref<1x128xf32, #tpu.memory_space<vmem>>, vector<1x128xf32>
    %3 = arith.truncf %0 : vector<8x128xf32> to vector<8x128xbf16>
    %cst = arith.constant dense<0.000000e+00> : vector<8x128xf32>
    %4 = tpu.matmul %3, %1, %cst {dimension_numbers = #tpu.dot_dimension_numbers<[1], [0], [0], [1], [0, 0, 1, 1], [], []>} : vector<8x128xbf16>, vector<128x128xbf16>, vector<8x128xf32> -> vector<8x128xf32>
    %5 = vector.broadcast %2 : vector<1x128xf32> to vector<8x128xf32>
    %6 = arith.addf %4, %5 : vector<8x128xf32>
    %cst_5 = arith.constant 0.000000e+00 : f32
    %7 = vector.broadcast %cst_5 : f32 to vector<8x128xf32>
    %8 = arith.maximumf %6, %7 : vector<8x128xf32>
    %c0_6 = arith.constant 0 : index
    %c0_7 = arith.constant 0 : index
    %9 = vector.load %arg4[%c0_6, %c0_7] : memref<128x128xbf16, #tpu.memory_space<vmem>>, vector<128x128xbf16>
    %c0_8 = arith.constant 0 : index
    %c0_9 = arith.constant 0 : index
    %10 = vector.load %arg5[%c0_8, %c0_9] : memref<1x128xf32, #tpu.memory_space<vmem>>, vector<1x128xf32>
    %11 = arith.truncf %8 : vector<8x128xf32> to vector<8x128xbf16>
    %cst_10 = arith.constant dense<0.000000e+00> : vector<8x128xf32>
    %12 = tpu.matmul %11, %9, %cst_10 {dimension_numbers = #tpu.dot_dimension_numbers<[1], [0], [0], [1], [0, 0, 1, 1], [], []>} : vector<8x128xbf16>, vector<128x128xbf16>, vector<8x128xf32> -> vector<8x128xf32>
    %13 = vector.broadcast %10 : vector<1x128xf32> to vector<8x128xf32>
    %14 = arith.addf %12, %13 : vector<8x128xf32>
    %cst_11 = arith.constant 0.000000e+00 : f32
    %15 = vector.broadcast %cst_11 : f32 to vector<8x128xf32>
    %16 = arith.maximumf %14, %15 : vector<8x128xf32>
    %c0_12 = arith.constant 0 : index
    %c0_13 = arith.constant 0 : index
    %17 = vector.load %arg6[%c0_12, %c0_13] : memref<128x128xbf16, #tpu.memory_space<vmem>>, vector<128x128xbf16>
    %c0_14 = arith.constant 0 : index
    %c0_15 = arith.constant 0 : index
    %18 = vector.load %arg7[%c0_14, %c0_15] : memref<1x128xf32, #tpu.memory_space<vmem>>, vector<1x128xf32>
    %19 = arith.truncf %16 : vector<8x128xf32> to vector<8x128xbf16>
    %cst_16 = arith.constant dense<0.000000e+00> : vector<8x128xf32>
    %20 = tpu.matmul %19, %17, %cst_16 {dimension_numbers = #tpu.dot_dimension_numbers<[1], [0], [0], [1], [0, 0, 1, 1], [], []>} : vector<8x128xbf16>, vector<128x128xbf16>, vector<8x128xf32> -> vector<8x128xf32>
    %21 = vector.broadcast %18 : vector<1x128xf32> to vector<8x128xf32>
    %22 = arith.addf %20, %21 : vector<8x128xf32>
    %cst_17 = arith.constant 0.000000e+00 : f32
    %23 = vector.broadcast %cst_17 : f32 to vector<8x128xf32>
    %24 = arith.maximumf %22, %23 : vector<8x128xf32>
    %c0_18 = arith.constant 0 : index
    %c0_19 = arith.constant 0 : index
    %25 = vector.load %arg8[%c0_18, %c0_19] : memref<128x128xbf16, #tpu.memory_space<vmem>>, vector<128x128xbf16>
    %c0_20 = arith.constant 0 : index
    %c0_21 = arith.constant 0 : index
    %26 = vector.load %arg9[%c0_20, %c0_21] : memref<1x128xf32, #tpu.memory_space<vmem>>, vector<1x128xf32>
    %27 = arith.truncf %24 : vector<8x128xf32> to vector<8x128xbf16>
    %cst_22 = arith.constant dense<0.000000e+00> : vector<8x128xf32>
    %28 = tpu.matmul %27, %25, %cst_22 {dimension_numbers = #tpu.dot_dimension_numbers<[1], [0], [0], [1], [0, 0, 1, 1], [], []>} : vector<8x128xbf16>, vector<128x128xbf16>, vector<8x128xf32> -> vector<8x128xf32>
    %29 = vector.broadcast %26 : vector<1x128xf32> to vector<8x128xf32>
    %30 = arith.addf %28, %29 : vector<8x128xf32>
    %c0_23 = arith.constant 0 : index
    %c0_24 = arith.constant 0 : index
    %31 = vector.load %arg10[%c0_23, %c0_24] : memref<8x128xf32, #tpu.memory_space<vmem>>, vector<8x128xf32>
    tpu.vector_store %arg10[%c0_23, %c0_24], %30 {strides = array<i32>} : memref<8x128xf32, #tpu.memory_space<vmem>>, vector<8x128xf32>,
    return
  }
  func.func @transform_0(%arg0: i32) -> (i32, i32) {
    %c0_i32 = arith.constant 0 : i32
    %c0_i32_0 = arith.constant 0 : i32
    return %arg0, %c0_i32 : i32, i32
  }
  func.func @transform_1(%arg0: i32) -> (i32, i32) {
    %c0_i32 = arith.constant 0 : i32
    %c0_i32_0 = arith.constant 0 : i32
    %c0_i32_1 = arith.constant 0 : i32
    return %c0_i32, %c0_i32_0 : i32, i32
  }
  func.func @transform_2(%arg0: i32) -> (i32, i32) {
    %c0_i32 = arith.constant 0 : i32
    %c0_i32_0 = arith.constant 0 : i32
    %c0_i32_1 = arith.constant 0 : i32
    return %c0_i32, %c0_i32_0 : i32, i32
  }
  func.func @transform_3(%arg0: i32) -> (i32, i32) {
    %c0_i32 = arith.constant 0 : i32
    %c0_i32_0 = arith.constant 0 : i32
    %c0_i32_1 = arith.constant 0 : i32
    return %c0_i32, %c0_i32_0 : i32, i32
  }
  func.func @transform_4(%arg0: i32) -> (i32, i32) {
    %c0_i32 = arith.constant 0 : i32
    %c0_i32_0 = arith.constant 0 : i32
    %c0_i32_1 = arith.constant 0 : i32
    return %c0_i32, %c0_i32_0 : i32, i32
  }
  func.func @transform_5(%arg0: i32) -> (i32, i32) {
    %c0_i32 = arith.constant 0 : i32
    %c0_i32_0 = arith.constant 0 : i32
    %c0_i32_1 = arith.constant 0 : i32
    return %c0_i32, %c0_i32_0 : i32, i32
  }
  func.func @transform_6(%arg0: i32) -> (i32, i32) {
    %c0_i32 = arith.constant 0 : i32
    %c0_i32_0 = arith.constant 0 : i32
    %c0_i32_1 = arith.constant 0 : i32
    return %c0_i32, %c0_i32_0 : i32, i32
  }
  func.func @transform_7(%arg0: i32) -> (i32, i32) {
    %c0_i32 = arith.constant 0 : i32
    %c0_i32_0 = arith.constant 0 : i32
    %c0_i32_1 = arith.constant 0 : i32
    return %c0_i32, %c0_i32_0 : i32, i32
  }
  func.func @transform_8(%arg0: i32) -> (i32, i32) {
    %c0_i32 = arith.constant 0 : i32
    %c0_i32_0 = arith.constant 0 : i32
    %c0_i32_1 = arith.constant 0 : i32
    return %c0_i32, %c0_i32_0 : i32, i32
  }
  func.func @transform_9(%arg0: i32) -> (i32, i32) {
    %c0_i32 = arith.constant 0 : i32
    %c0_i32_0 = arith.constant 0 : i32
    return %arg0, %c0_i32 : i32, i32
  }
}

</mosaic_0001>

<llo_original>
// kernel: tpu_custom_call.1
$region0: #{tpu_custom_call.1}
  #allocation0 [shape = 'u32[]', space=smem, size = 0x4, offset = 0x4, fixed_abs, tag = 'smem constant byte address 0x4 - core index']
  #allocation1 [shape = 'u32[144,128]{1,0:T(1,128)}', space=vmem, size = 0x12000, scoped, tag = 'internal scratch']
  %s0 = inlined_call_operand.hbm [shape: f32[8,128], index: 0, kind: input, shape index: {}]
  %s1 = inlined_call_operand.hbm [shape: bf16[128,128], index: 1, kind: input, shape index: {}]
  %s2 = inlined_call_operand.vmem [shape: f32[1,128], index: 2, kind: input, shape index: {}]
  %s3 = inlined_call_operand.hbm [shape: bf16[128,128], index: 3, kind: input, shape index: {}]
  %s4 = inlined_call_operand.vmem [shape: f32[1,128], index: 4, kind: input, shape index: {}]
  %s5 = inlined_call_operand.hbm [shape: bf16[128,128], index: 5, kind: input, shape index: {}]
  %s6 = inlined_call_operand.vmem [shape: f32[1,128], index: 6, kind: input, shape index: {}]
  %s7 = inlined_call_operand.hbm [shape: bf16[128,128], index: 7, kind: input, shape index: {}]
  %s8 = inlined_call_operand.vmem [shape: f32[1,128], index: 8, kind: input, shape index: {}]
  %s9 = inlined_call_operand.hbm [shape: f32[8,128], index: 9, kind: output, shape index: {}]
  %s10 = sld [smem:[#allocation0]]
  $region66: #{tpu_custom_call.1} parent=0
    _
  %s12 = ssub.s32 1, %s10
  %s13 = scalar_select 0, %s12, %s10
  $region1: #{tpu_custom_call.1} parent=0
    #allocation2 [shape = 'u8[4096]{0}', space=vmem, size = 0x1000, scoped, tag = 'input window, operand 0, single buffered']
    #allocation3 [shape = 's32[1]{0}', space=sflag, size = 0x4, scoped, tag = 'scoped memory for tpu_custom_call.1']
    #allocation4 [shape = 's32[1]{0}', space=sflag, size = 0x4, scoped, tag = 'scoped memory for tpu_custom_call.1']
    #allocation5 [shape = 'u8[32768]{0}', space=vmem, size = 0x8000, scoped, tag = 'input window, operand 1, single buffered']
    #allocation6 [shape = 's32[1]{0}', space=sflag, size = 0x4, scoped, tag = 'scoped memory for tpu_custom_call.1']
    #allocation7 [shape = 'u8[32768]{0}', space=vmem, size = 0x8000, scoped, tag = 'input window, operand 3, single buffered']
    #allocation8 [shape = 'u8[32768]{0}', space=vmem, size = 0x8000, scoped, tag = 'input window, operand 5, single buffered']
    #allocation9 [shape = 's32[1]{0}', space=sflag, size = 0x4, scoped, tag = 'scoped memory for tpu_custom_call.1']
    #allocation10 [shape = 'u8[32768]{0}', space=vmem, size = 0x8000, scoped, tag = 'input window, operand 7, single buffered']
    #allocation11 [shape = 'u8[4096]{0}', space=vmem, size = 0x1000, scoped, tag = 'output window, operand 0, single buffered']
    %14 = vsyncpa [#allocation3], 0
    %15 = vsyncpa [#allocation6], 0
    %16 = vsyncpa [#allocation9], 0
    %17 = vsyncpa [#allocation4], 0
    // Predicated region
    $region2: #{tpu_custom_call.1} parent=1 // pred_check
      _
    $region3: #{tpu_custom_call.1} parent=1 // pred_check_branch
      %19 = sbr.rel (0) target = $region5
    $region4: #{tpu_custom_call.1} parent=1 // pred_region
      %s21 = ssub.s32 128, 128
      %22 = vsyncadd [#allocation3], %s21
      %s24 = sshll.u32 [#allocation2], 4
      %s25 = int_to_ptr.vmem [resolvable:$true] %s24
      %27 = dma.hbm_to_vmem [thread:$0]  %s0, 128, %s25, [#allocation3]
    $region5: #{tpu_custom_call.1} parent=1 // pred_fallthru
      _
    // Predicated region
    $region6: #{tpu_custom_call.1} parent=1 // pred_check
      _
    $region7: #{tpu_custom_call.1} parent=1 // pred_check_branch
      %29 = sbr.rel (0) target = $region9
    $region8: #{tpu_custom_call.1} parent=1 // pred_region
      %s31 = ssub.s32 1024, 1024
      %32 = vsyncadd [#allocation6], %s31
      %s33 = sshll.u32 [#allocation5], 4
      %s34 = int_to_ptr.vmem [resolvable:$true] %s33
      %39 = dma.hbm_to_vmem [thread:$0]  %s1, 1024, %s34, [#allocation6], 64, 64, 4
    $region9: #{tpu_custom_call.1} parent=1 // pred_fallthru
      _
    // Predicated region
    $region10: #{tpu_custom_call.1} parent=1 // pred_check
      _
    $region11: #{tpu_custom_call.1} parent=1 // pred_check_branch
      %41 = sbr.rel (0) target = $region13
    $region12: #{tpu_custom_call.1} parent=1 // pred_region
      _
    $region13: #{tpu_custom_call.1} parent=1 // pred_fallthru
      _
    // Predicated region
    $region14: #{tpu_custom_call.1} parent=1 // pred_check
      _
    $region15: #{tpu_custom_call.1} parent=1 // pred_check_branch
      %43 = sbr.rel (0) target = $region17
    $region16: #{tpu_custom_call.1} parent=1 // pred_region
      %s45 = ssub.s32 1024, 1024
      %46 = vsyncadd [#allocation6], %s45
      %s47 = sshll.u32 [#allocation7], 4
      %s48 = int_to_ptr.vmem [resolvable:$true] %s47
      %53 = dma.hbm_to_vmem [thread:$0]  %s3, 1024, %s48, [#allocation6], 64, 64, 4
    $region17: #{tpu_custom_call.1} parent=1 // pred_fallthru
      _
    // Predicated region
    $region18: #{tpu_custom_call.1} parent=1 // pred_check
      _
    $region19: #{tpu_custom_call.1} parent=1 // pred_check_branch
      %55 = sbr.rel (0) target = $region21
    $region20: #{tpu_custom_call.1} parent=1 // pred_region
      _
    $region21: #{tpu_custom_call.1} parent=1 // pred_fallthru
      _
    // Predicated region
    $region22: #{tpu_custom_call.1} parent=1 // pred_check
      _
    $region23: #{tpu_custom_call.1} parent=1 // pred_check_branch
      %57 = sbr.rel (0) target = $region25
    $region24: #{tpu_custom_call.1} parent=1 // pred_region
      %s59 = ssub.s32 1024, 1024
      %60 = vsyncadd [#allocation9], %s59
      %s61 = sshll.u32 [#allocation8], 4
      %s62 = int_to_ptr.vmem [resolvable:$true] %s61
      %67 = dma.hbm_to_vmem [thread:$0]  %s5, 1024, %s62, [#allocation9], 64, 64, 4
    $region25: #{tpu_custom_call.1} parent=1 // pred_fallthru
      _
    // Predicated region
    $region26: #{tpu_custom_call.1} parent=1 // pred_check
      _
    $region27: #{tpu_custom_call.1} parent=1 // pred_check_branch
      %69 = sbr.rel (0) target = $region29
    $region28: #{tpu_custom_call.1} parent=1 // pred_region
      _
    $region29: #{tpu_custom_call.1} parent=1 // pred_fallthru
      _
    // Predicated region
    $region30: #{tpu_custom_call.1} parent=1 // pred_check
      _
    $region31: #{tpu_custom_call.1} parent=1 // pred_check_branch
      %71 = sbr.rel (0) target = $region33
    $region32: #{tpu_custom_call.1} parent=1 // pred_region
      %s73 = ssub.s32 1024, 1024
      %74 = vsyncadd [#allocation9], %s73
      %s75 = sshll.u32 [#allocation10], 4
      %s76 = int_to_ptr.vmem [resolvable:$true] %s75
      %81 = dma.hbm_to_vmem [thread:$0]  %s7, 1024, %s76, [#allocation9], 64, 64, 4
    $region33: #{tpu_custom_call.1} parent=1 // pred_fallthru
      _
    // Predicated region
    $region34: #{tpu_custom_call.1} parent=1 // pred_check
      _
    $region35: #{tpu_custom_call.1} parent=1 // pred_check_branch
      %83 = sbr.rel (0) target = $region37
    $region36: #{tpu_custom_call.1} parent=1 // pred_region
      _
    $region37: #{tpu_custom_call.1} parent=1 // pred_fallthru
      _
    // Predicated region
    $region38: #{tpu_custom_call.1} parent=1 // pred_check
      _
    $region39: #{tpu_custom_call.1} parent=1 // pred_check_branch
      %85 = sbr.rel (0) target = $region41
    $region40: #{tpu_custom_call.1} parent=1 // pred_region
      %86 = dma.done [#allocation3], 128
    $region41: #{tpu_custom_call.1} parent=1 // pred_fallthru
      _
    // Predicated region
    $region42: #{tpu_custom_call.1} parent=1 // pred_check
      _
    $region43: #{tpu_custom_call.1} parent=1 // pred_check_branch
      %88 = sbr.rel (0) target = $region45
    $region44: #{tpu_custom_call.1} parent=1 // pred_region
      %89 = dma.done [#allocation6], 1024
    $region45: #{tpu_custom_call.1} parent=1 // pred_fallthru
      _
    // Predicated region
    $region46: #{tpu_custom_call.1} parent=1 // pred_check
      _
    $region47: #{tpu_custom_call.1} parent=1 // pred_check_branch
      %91 = sbr.rel (0) target = $region49
    $region48: #{tpu_custom_call.1} parent=1 // pred_region
      %92 = dma.done [#allocation6], 1024
    $region49: #{tpu_custom_call.1} parent=1 // pred_fallthru
      _
    // Predicated region
    $region50: #{tpu_custom_call.1} parent=1 // pred_check
      _
    $region51: #{tpu_custom_call.1} parent=1 // pred_check_branch
      %94 = sbr.rel (0) target = $region53
    $region52: #{tpu_custom_call.1} parent=1 // pred_region
      %95 = dma.done [#allocation9], 1024
    $region53: #{tpu_custom_call.1} parent=1 // pred_fallthru
      _
    // Predicated region
    $region54: #{tpu_custom_call.1} parent=1 // pred_check
      _
    $region55: #{tpu_custom_call.1} parent=1 // pred_check_branch
      %97 = sbr.rel (0) target = $region57
    $region56: #{tpu_custom_call.1} parent=1 // pred_region
      %98 = dma.done [#allocation9], 1024
    $region57: #{tpu_custom_call.1} parent=1 // pred_fallthru
      _
    %v100 = vld [vmem:[#allocation2] sm:$0xff]
    %v101 = vld [vmem:[#allocation5] sm:$0xf]
    %v102 = vld [vmem:[#allocation5 + $0x4] sm:$0xf]
    %v103 = vld [vmem:[#allocation5 + $0x8] sm:$0xf]
    %v104 = vld [vmem:[#allocation5 + $0xc] sm:$0xf]
    %v105 = vld [vmem:[#allocation5 + $0x10] sm:$0xf]
    %v106 = vld [vmem:[#allocation5 + $0x14] sm:$0xf]
    %v107 = vld [vmem:[#allocation5 + $0x18] sm:$0xf]
    %v108 = vld [vmem:[#allocation5 + $0x1c] sm:$0xf]
    %v109 = vld [vmem:[#allocation5 + $0x20] sm:$0xf]
    %v110 = vld [vmem:[#allocation5 + $0x24] sm:$0xf]
    %v111 = vld [vmem:[#allocation5 + $0x28] sm:$0xf]
    %v112 = vld [vmem:[#allocation5 + $0x2c] sm:$0xf]
    %v113 = vld [vmem:[#allocation5 + $0x30] sm:$0xf]
    %v114 = vld [vmem:[#allocation5 + $0x34] sm:$0xf]
    %v115 = vld [vmem:[#allocation5 + $0x38] sm:$0xf]
    %v116 = vld [vmem:[#allocation5 + $0x3c] sm:$0xf]
    %v117 = vld [vmem:[%s2] sm:$0x1]
    %v118 = vpack.c.bf16 %v100, %v100
    %v120 = vlaneseq
    %v121 = vshrl.u32 %v120, 7
    %v122 = vsub.s32 0, %v121
    %v123 = vrot.slane %v117, %v122
    %v141 = vunpack.c.l.b16 %v101
    %v142 = vunpack.c.l.b16 %v102
    %v143 = vunpack.c.l.b16 %v103
    %v144 = vunpack.c.l.b16 %v104
    %v145 = vunpack.c.l.b16 %v105
    %v146 = vunpack.c.l.b16 %v106
    %v147 = vunpack.c.l.b16 %v107
    %v148 = vunpack.c.l.b16 %v108
    %v149 = vunpack.c.l.b16 %v109
    %v150 = vunpack.c.l.b16 %v110
    %v151 = vunpack.c.l.b16 %v111
    %v152 = vunpack.c.l.b16 %v112
    %v153 = vunpack.c.l.b16 %v113
    %v154 = vunpack.c.l.b16 %v114
    %v155 = vunpack.c.l.b16 %v115
    %v156 = vunpack.c.l.b16 %v116
    %v157 = vpack.c.b16 %v142, %v141
    %v158 = vpack.c.b16 %v144, %v143
    %v159 = vpack.c.b16 %v146, %v145
    %v160 = vpack.c.b16 %v148, %v147
    %v161 = vpack.c.b16 %v150, %v149
    %v162 = vpack.c.b16 %v152, %v151
    %v163 = vpack.c.b16 %v154, %v153
    %v164 = vpack.c.b16 %v156, %v155
    %173 = vmatprep.subr.bf16.mxu0 0
    %174 = vmatpush1.bf16.msra.mxu0 %v157
    %175 = vmatprep.subr.bf16.mxu0 0
    %176 = vmatpush1.bf16.msra.mxu0 %v158
    %177 = vmatprep.subr.bf16.mxu0 0
    %178 = vmatpush1.bf16.msra.mxu0 %v159
    %179 = vmatprep.subr.bf16.mxu0 0
    %180 = vmatpush1.bf16.msra.mxu0 %v160
    %181 = vmatprep.subr.bf16.mxu0 0
    %182 = vmatpush1.bf16.msra.mxu0 %v161
    %183 = vmatprep.subr.bf16.mxu0 0
    %184 = vmatpush1.bf16.msra.mxu0 %v162
    %185 = vmatprep.subr.bf16.mxu0 0
    %186 = vmatpush1.bf16.msra.mxu0 %v163
    %187 = vmatprep.subr.bf16.mxu0 0
    %188 = vmatpush1.bf16.msra.mxu0 %v164
    %189 = vmatprep.subr.bf16.mxu0 0
    %190 = vmatpush1.bf16.msra.mxu0 0
    %191 = vmatprep.subr.bf16.mxu0 0
    %192 = vmatpush1.bf16.msra.mxu0 0
    %193 = vmatprep.subr.bf16.mxu0 0
    %194 = vmatpush1.bf16.msra.mxu0 0
    %195 = vmatprep.subr.bf16.mxu0 0
    %196 = vmatpush1.bf16.msra.mxu0 0
    %197 = vmatprep.subr.bf16.mxu0 0
    %198 = vmatpush1.bf16.msra.mxu0 0
    %199 = vmatprep.subr.bf16.mxu0 0
    %200 = vmatpush1.bf16.msra.mxu0 0
    %201 = vmatprep.subr.bf16.mxu0 0
    %202 = vmatpush1.bf16.msra.mxu0 0
    %203 = vmatprep.subr.bf16.mxu0 0
    %204 = vmatpush1.bf16.msra.mxu0 0
    %205 = vmatprep.mubr.bf16.mxu0 0
    %206 = vmatmul.mubr.bf16.gmra.mrb[0].mxu0 %v118
    %v207 = vpop.f32.mrb[0].mxu0
    %v208 = vadd.f32 %v123, %v207
    %v209 = vpop.f32.mrb[0].mxu0
    %v210 = vpop.f32.mrb[0].mxu0
    %v211 = vpop.f32.mrb[0].mxu0
    %212 = vdwg.mxu0
    %v213 = vmax.f32 %v208, 0.0
    %v214 = vld [vmem:[#allocation7] sm:$0xf]
    %v215 = vld [vmem:[#allocation7 + $0x4] sm:$0xf]
    %v216 = vld [vmem:[#allocation7 + $0x8] sm:$0xf]
    %v217 = vld [vmem:[#allocation7 + $0xc] sm:$0xf]
    %v218 = vld [vmem:[#allocation7 + $0x10] sm:$0xf]
    %v219 = vld [vmem:[#allocation7 + $0x14] sm:$0xf]
    %v220 = vld [vmem:[#allocation7 + $0x18] sm:$0xf]
    %v221 = vld [vmem:[#allocation7 + $0x1c] sm:$0xf]
    %v222 = vld [vmem:[#allocation7 + $0x20] sm:$0xf]
    %v223 = vld [vmem:[#allocation7 + $0x24] sm:$0xf]
    %v224 = vld [vmem:[#allocation7 + $0x28] sm:$0xf]
    %v225 = vld [vmem:[#allocation7 + $0x2c] sm:$0xf]
    %v226 = vld [vmem:[#allocation7 + $0x30] sm:$0xf]
    %v227 = vld [vmem:[#allocation7 + $0x34] sm:$0xf]
    %v228 = vld [vmem:[#allocation7 + $0x38] sm:$0xf]
    %v229 = vld [vmem:[#allocation7 + $0x3c] sm:$0xf]
    %v230 = vld [vmem:[%s4] sm:$0x1]
    %v231 = vpack.c.bf16 %v213, %v213
    %v233 = vlaneseq
    %v234 = vshrl.u32 %v233, 7
    %v235 = vsub.s32 0, %v234
    %v236 = vrot.slane %v230, %v235
    %v254 = vunpack.c.l.b16 %v214
    %v255 = vunpack.c.l.b16 %v215
    %v256 = vunpack.c.l.b16 %v216
    %v257 = vunpack.c.l.b16 %v217
    %v258 = vunpack.c.l.b16 %v218
    %v259 = vunpack.c.l.b16 %v219
    %v260 = vunpack.c.l.b16 %v220
    %v261 = vunpack.c.l.b16 %v221
    %v262 = vunpack.c.l.b16 %v222
    %v263 = vunpack.c.l.b16 %v223
    %v264 = vunpack.c.l.b16 %v224
    %v265 = vunpack.c.l.b16 %v225
    %v266 = vunpack.c.l.b16 %v226
    %v267 = vunpack.c.l.b16 %v227
    %v268 = vunpack.c.l.b16 %v228
    %v269 = vunpack.c.l.b16 %v229
    %v270 = vpack.c.b16 %v255, %v254
    %v271 = vpack.c.b16 %v257, %v256
    %v272 = vpack.c.b16 %v259, %v258
    %v273 = vpack.c.b16 %v261, %v260
    %v274 = vpack.c.b16 %v263, %v262
    %v275 = vpack.c.b16 %v265, %v264
    %v276 = vpack.c.b16 %v267, %v266
    %v277 = vpack.c.b16 %v269, %v268
    %286 = vmatprep.subr.bf16.mxu0 0
    %287 = vmatpush1.bf16.msra.mxu0 %v270
    %288 = vmatprep.subr.bf16.mxu0 0
    %289 = vmatpush1.bf16.msra.mxu0 %v271
    %290 = vmatprep.subr.bf16.mxu0 0
    %291 = vmatpush1.bf16.msra.mxu0 %v272
    %292 = vmatprep.subr.bf16.mxu0 0
    %293 = vmatpush1.bf16.msra.mxu0 %v273
    %294 = vmatprep.subr.bf16.mxu0 0
    %295 = vmatpush1.bf16.msra.mxu0 %v274
    %296 = vmatprep.subr.bf16.mxu0 0
    %297 = vmatpush1.bf16.msra.mxu0 %v275
    %298 = vmatprep.subr.bf16.mxu0 0
    %299 = vmatpush1.bf16.msra.mxu0 %v276
    %300 = vmatprep.subr.bf16.mxu0 0
    %301 = vmatpush1.bf16.msra.mxu0 %v277
    %302 = vmatprep.subr.bf16.mxu0 0
    %303 = vmatpush1.bf16.msra.mxu0 0
    %304 = vmatprep.subr.bf16.mxu0 0
    %305 = vmatpush1.bf16.msra.mxu0 0
    %306 = vmatprep.subr.bf16.mxu0 0
    %307 = vmatpush1.bf16.msra.mxu0 0
    %308 = vmatprep.subr.bf16.mxu0 0
    %309 = vmatpush1.bf16.msra.mxu0 0
    %310 = vmatprep.subr.bf16.mxu0 0
    %311 = vmatpush1.bf16.msra.mxu0 0
    %312 = vmatprep.subr.bf16.mxu0 0
    %313 = vmatpush1.bf16.msra.mxu0 0
    %314 = vmatprep.subr.bf16.mxu0 0
    %315 = vmatpush1.bf16.msra.mxu0 0
    %316 = vmatprep.subr.bf16.mxu0 0
    %317 = vmatpush1.bf16.msra.mxu0 0
    %318 = vmatprep.mubr.bf16.mxu0 0
    %319 = vmatmul.mubr.bf16.gmra.mrb[0].mxu0 %v231
    %v320 = vpop.f32.mrb[0].mxu0
    %v321 = vadd.f32 %v236, %v320
    %v322 = vpop.f32.mrb[0].mxu0
    %v323 = vpop.f32.mrb[0].mxu0
    %v324 = vpop.f32.mrb[0].mxu0
    %325 = vdwg.mxu0
    %v326 = vmax.f32 %v321, 0.0
    %v327 = vld [vmem:[#allocation8] sm:$0xf]
    %v328 = vld [vmem:[#allocation8 + $0x4] sm:$0xf]
    %v329 = vld [vmem:[#allocation8 + $0x8] sm:$0xf]
    %v330 = vld [vmem:[#allocation8 + $0xc] sm:$0xf]
    %v331 = vld [vmem:[#allocation8 + $0x10] sm:$0xf]
    %v332 = vld [vmem:[#allocation8 + $0x14] sm:$0xf]
    %v333 = vld [vmem:[#allocation8 + $0x18] sm:$0xf]
    %v334 = vld [vmem:[#allocation8 + $0x1c] sm:$0xf]
    %v335 = vld [vmem:[#allocation8 + $0x20] sm:$0xf]
    %v336 = vld [vmem:[#allocation8 + $0x24] sm:$0xf]
    %v337 = vld [vmem:[#allocation8 + $0x28] sm:$0xf]
    %v338 = vld [vmem:[#allocation8 + $0x2c] sm:$0xf]
    %v339 = vld [vmem:[#allocation8 + $0x30] sm:$0xf]
    %v340 = vld [vmem:[#allocation8 + $0x34] sm:$0xf]
    %v341 = vld [vmem:[#allocation8 + $0x38] sm:$0xf]
    %v342 = vld [vmem:[#allocation8 + $0x3c] sm:$0xf]
    %v343 = vld [vmem:[%s6] sm:$0x1]
    %v344 = vpack.c.bf16 %v326, %v326
    %v346 = vlaneseq
    %v347 = vshrl.u32 %v346, 7
    %v348 = vsub.s32 0, %v347
    %v349 = vrot.slane %v343, %v348
    %v367 = vunpack.c.l.b16 %v327
    %v368 = vunpack.c.l.b16 %v328
    %v369 = vunpack.c.l.b16 %v329
    %v370 = vunpack.c.l.b16 %v330
    %v371 = vunpack.c.l.b16 %v331
    %v372 = vunpack.c.l.b16 %v332
    %v373 = vunpack.c.l.b16 %v333
    %v374 = vunpack.c.l.b16 %v334
    %v375 = vunpack.c.l.b16 %v335
    %v376 = vunpack.c.l.b16 %v336
    %v377 = vunpack.c.l.b16 %v337
    %v378 = vunpack.c.l.b16 %v338
    %v379 = vunpack.c.l.b16 %v339
    %v380 = vunpack.c.l.b16 %v340
    %v381 = vunpack.c.l.b16 %v341
    %v382 = vunpack.c.l.b16 %v342
    %v383 = vpack.c.b16 %v368, %v367
    %v384 = vpack.c.b16 %v370, %v369
    %v385 = vpack.c.b16 %v372, %v371
    %v386 = vpack.c.b16 %v374, %v373
    %v387 = vpack.c.b16 %v376, %v375
    %v388 = vpack.c.b16 %v378, %v377
    %v389 = vpack.c.b16 %v380, %v379
    %v390 = vpack.c.b16 %v382, %v381
    %399 = vmatprep.subr.bf16.mxu0 0
    %400 = vmatpush1.bf16.msra.mxu0 %v383
    %401 = vmatprep.subr.bf16.mxu0 0
    %402 = vmatpush1.bf16.msra.mxu0 %v384
    %403 = vmatprep.subr.bf16.mxu0 0
    %404 = vmatpush1.bf16.msra.mxu0 %v385
    %405 = vmatprep.subr.bf16.mxu0 0
    %406 = vmatpush1.bf16.msra.mxu0 %v386
    %407 = vmatprep.subr.bf16.mxu0 0
    %408 = vmatpush1.bf16.msra.mxu0 %v387
    %409 = vmatprep.subr.bf16.mxu0 0
    %410 = vmatpush1.bf16.msra.mxu0 %v388
    %411 = vmatprep.subr.bf16.mxu0 0
    %412 = vmatpush1.bf16.msra.mxu0 %v389
    %413 = vmatprep.subr.bf16.mxu0 0
    %414 = vmatpush1.bf16.msra.mxu0 %v390
    %415 = vmatprep.subr.bf16.mxu0 0
    %416 = vmatpush1.bf16.msra.mxu0 0
    %417 = vmatprep.subr.bf16.mxu0 0
    %418 = vmatpush1.bf16.msra.mxu0 0
    %419 = vmatprep.subr.bf16.mxu0 0
    %420 = vmatpush1.bf16.msra.mxu0 0
    %421 = vmatprep.subr.bf16.mxu0 0
    %422 = vmatpush1.bf16.msra.mxu0 0
    %423 = vmatprep.subr.bf16.mxu0 0
    %424 = vmatpush1.bf16.msra.mxu0 0
    %425 = vmatprep.subr.bf16.mxu0 0
    %426 = vmatpush1.bf16.msra.mxu0 0
    %427 = vmatprep.subr.bf16.mxu0 0
    %428 = vmatpush1.bf16.msra.mxu0 0
    %429 = vmatprep.subr.bf16.mxu0 0
    %430 = vmatpush1.bf16.msra.mxu0 0
    %431 = vmatprep.mubr.bf16.mxu0 0
    %432 = vmatmul.mubr.bf16.gmra.mrb[0].mxu0 %v344
    %v433 = vpop.f32.mrb[0].mxu0
    %v434 = vadd.f32 %v349, %v433
    %v435 = vpop.f32.mrb[0].mxu0
    %v436 = vpop.f32.mrb[0].mxu0
    %v437 = vpop.f32.mrb[0].mxu0
    %438 = vdwg.mxu0
    %v439 = vmax.f32 %v434, 0.0
    %v440 = vld [vmem:[#allocation10] sm:$0xf]
    %v441 = vld [vmem:[#allocation10 + $0x4] sm:$0xf]
    %v442 = vld [vmem:[#allocation10 + $0x8] sm:$0xf]
    %v443 = vld [vmem:[#allocation10 + $0xc] sm:$0xf]
    %v444 = vld [vmem:[#allocation10 + $0x10] sm:$0xf]
    %v445 = vld [vmem:[#allocation10 + $0x14] sm:$0xf]
    %v446 = vld [vmem:[#allocation10 + $0x18] sm:$0xf]
    %v447 = vld [vmem:[#allocation10 + $0x1c] sm:$0xf]
    %v448 = vld [vmem:[#allocation10 + $0x20] sm:$0xf]
    %v449 = vld [vmem:[#allocation10 + $0x24] sm:$0xf]
    %v450 = vld [vmem:[#allocation10 + $0x28] sm:$0xf]
    %v451 = vld [vmem:[#allocation10 + $0x2c] sm:$0xf]
    %v452 = vld [vmem:[#allocation10 + $0x30] sm:$0xf]
    %v453 = vld [vmem:[#allocation10 + $0x34] sm:$0xf]
    %v454 = vld [vmem:[#allocation10 + $0x38] sm:$0xf]
    %v455 = vld [vmem:[#allocation10 + $0x3c] sm:$0xf]
    %v456 = vld [vmem:[%s8] sm:$0x1]
    %v457 = vpack.c.bf16 %v439, %v439
    %v459 = vlaneseq
    %v460 = vshrl.u32 %v459, 7
    %v461 = vsub.s32 0, %v460
    %v462 = vrot.slane %v456, %v461
    %v480 = vunpack.c.l.b16 %v440
    %v481 = vunpack.c.l.b16 %v441
    %v482 = vunpack.c.l.b16 %v442
    %v483 = vunpack.c.l.b16 %v443
    %v484 = vunpack.c.l.b16 %v444
    %v485 = vunpack.c.l.b16 %v445
    %v486 = vunpack.c.l.b16 %v446
    %v487 = vunpack.c.l.b16 %v447
    %v488 = vunpack.c.l.b16 %v448
    %v489 = vunpack.c.l.b16 %v449
    %v490 = vunpack.c.l.b16 %v450
    %v491 = vunpack.c.l.b16 %v451
    %v492 = vunpack.c.l.b16 %v452
    %v493 = vunpack.c.l.b16 %v453
    %v494 = vunpack.c.l.b16 %v454
    %v495 = vunpack.c.l.b16 %v455
    %v496 = vpack.c.b16 %v481, %v480
    %v497 = vpack.c.b16 %v483, %v482
    %v498 = vpack.c.b16 %v485, %v484
    %v499 = vpack.c.b16 %v487, %v486
    %v500 = vpack.c.b16 %v489, %v488
    %v501 = vpack.c.b16 %v491, %v490
    %v502 = vpack.c.b16 %v493, %v492
    %v503 = vpack.c.b16 %v495, %v494
    %512 = vmatprep.subr.bf16.mxu0 0
    %513 = vmatpush1.bf16.msra.mxu0 %v496
    %514 = vmatprep.subr.bf16.mxu0 0
    %515 = vmatpush1.bf16.msra.mxu0 %v497
    %516 = vmatprep.subr.bf16.mxu0 0
    %517 = vmatpush1.bf16.msra.mxu0 %v498
    %518 = vmatprep.subr.bf16.mxu0 0
    %519 = vmatpush1.bf16.msra.mxu0 %v499
    %520 = vmatprep.subr.bf16.mxu0 0
    %521 = vmatpush1.bf16.msra.mxu0 %v500
    %522 = vmatprep.subr.bf16.mxu0 0
    %523 = vmatpush1.bf16.msra.mxu0 %v501
    %524 = vmatprep.subr.bf16.mxu0 0
    %525 = vmatpush1.bf16.msra.mxu0 %v502
    %526 = vmatprep.subr.bf16.mxu0 0
    %527 = vmatpush1.bf16.msra.mxu0 %v503
    %528 = vmatprep.subr.bf16.mxu0 0
    %529 = vmatpush1.bf16.msra.mxu0 0
    %530 = vmatprep.subr.bf16.mxu0 0
    %531 = vmatpush1.bf16.msra.mxu0 0
    %532 = vmatprep.subr.bf16.mxu0 0
    %533 = vmatpush1.bf16.msra.mxu0 0
    %534 = vmatprep.subr.bf16.mxu0 0
    %535 = vmatpush1.bf16.msra.mxu0 0
    %536 = vmatprep.subr.bf16.mxu0 0
    %537 = vmatpush1.bf16.msra.mxu0 0
    %538 = vmatprep.subr.bf16.mxu0 0
    %539 = vmatpush1.bf16.msra.mxu0 0
    %540 = vmatprep.subr.bf16.mxu0 0
    %541 = vmatpush1.bf16.msra.mxu0 0
    %542 = vmatprep.subr.bf16.mxu0 0
    %543 = vmatpush1.bf16.msra.mxu0 0
    %544 = vmatprep.mubr.bf16.mxu0 0
    %545 = vmatmul.mubr.bf16.gmra.mrb[0].mxu0 %v457
    %v546 = vpop.f32.mrb[0].mxu0
    %v547 = vadd.f32 %v462, %v546
    %v548 = vpop.f32.mrb[0].mxu0
    %v549 = vpop.f32.mrb[0].mxu0
    %v550 = vpop.f32.mrb[0].mxu0
    %551 = vdwg.mxu0
    %552 = vst [vmem:[#allocation11] sm:$0xff] %v547
    // Predicated region
    $region58: #{tpu_custom_call.1} parent=1 // pred_check
      _
    $region59: #{tpu_custom_call.1} parent=1 // pred_check_branch
      %554 = sbr.rel (0) target = $region61
    $region60: #{tpu_custom_call.1} parent=1 // pred_region
      %s556 = ssub.s32 128, 128
      %557 = vsyncadd [#allocation4], %s556
      %s559 = sshll.u32 [#allocation11], 4
      %s560 = int_to_ptr.vmem [resolvable:$true] %s559
      %562 = dma.vmem_to_hbm [thread:$0]  %s560, 128, %s9, [#allocation4]
    $region61: #{tpu_custom_call.1} parent=1 // pred_fallthru
      _
    // Predicated region
    $region62: #{tpu_custom_call.1} parent=1 // pred_check
      _
    $region63: #{tpu_custom_call.1} parent=1 // pred_check_branch
      %564 = sbr.rel (0) target = $region65
    $region64: #{tpu_custom_call.1} parent=1 // pred_region
      %565 = dma.done [#allocation4], 128
    $region65: #{tpu_custom_call.1} parent=1 // pred_fallthru
      _
    %566 = vsyncpa [#allocation3], 1
    %567 = vsyncpa [#allocation6], 1
    %568 = vsyncpa [#allocation9], 1
    %569 = vsyncpa [#allocation4], 1

</llo_original>
